<compile_context>
chip_gen: v6e
topology: v6e:2x2x1
jax: 0.10.0
libtpu: 0.0.40
codegen_flags: <defaults>
</compile_context>

<pallas_src>
import functools

import jax
import jax.numpy as jnp
from jax.experimental import pallas as pl
from jax.experimental.pallas import tpu as pltpu


def _layernorm_kernel(x_ref, a_ref, b_ref, o_ref, *, eps: float,
                      n_features: int, n_segments: int):
    """x_ref: (tile_rows, n_segments * n_features); a_ref/b_ref: (1, same)."""
    x = x_ref[...].astype(jnp.float32)
    a = a_ref[...].astype(jnp.float32)
    b = b_ref[...].astype(jnp.float32)

    F = n_features
    outs = []
    for s in range(n_segments):           # static Python loop, k is small (<=128)
        seg = x[:, s * F:(s + 1) * F]      # static lane slice (one logical row)
        mu = jnp.mean(seg, axis=-1, keepdims=True)
        diff = seg - mu
        # torch.std default: unbiased (divide by N-1).
        var = jnp.sum(diff * diff, axis=-1, keepdims=True) / jnp.float32(F - 1)
        sigma = jnp.sqrt(var)
        # Per-row (T,1) reciprocal: negligible cost, kept exact for f32 parity.
        inv = pl.reciprocal(sigma + jnp.float32(eps), approx=False)
        outs.append(diff * inv)

    y = outs[0] if n_segments == 1 else jnp.concatenate(outs, axis=-1)
    o_ref[...] = (y * a + b).astype(o_ref.dtype)


def _pick_tiling(packed_rows, width, itemsize):
    """Choose (tile_rows, vmem_limit_bytes) from the device's VMEM capacity."""
    # Sublane packing multiple per dtype width.
    sub = {4: 8, 2: 16, 1: 32}.get(int(itemsize), 8)

    try:
        vmem_cap = int(pltpu.get_tpu_info().vmem_capacity_bytes)
    except Exception:
        vmem_cap = 64 * 1024 * 1024  # conservative fallback (v7x per-TC size)

    # Budget 1/4 of VMEM for: double-buffered in + out tiles (4 * itemsize per
    # element) plus ~3 f32 working copies (x upcast, per-segment diffs, y).
    budget = vmem_cap // 4
    bytes_per_row = width * (4 * itemsize + 3 * 4)
    # No artificial row cap: the budget term alone bounds the tile, so each
    # grid step streams multiple MiB and amortizes the ~0.35us step overhead.
    tile_rows = max(sub, budget // max(bytes_per_row, 1))
    tile_rows = (tile_rows // sub) * sub
    if tile_rows >= packed_rows:
        # Full-extent block: always legal regardless of (8,128) alignment.
        tile_rows = packed_rows

    # Scoped VMEM limit: 3/4 of capacity, capped at 100 MiB.
    # v7x: 48 MiB of 64 MiB/TC; v5e/v6e: 96 MiB of 128 MiB.
    vmem_limit = int(min(vmem_cap * 3 // 4, 100 << 20))
    vmem_limit = max(vmem_limit, 32 << 20)
    return tile_rows, vmem_limit


def layer_norm(x, a, b, eps=1e-6, tile_rows=None):
    """x: (..., features); a, b: (features,). Normalizes over the last axis."""
    orig_shape = x.shape
    features = int(orig_shape[-1])
    rows = 1
    for d in orig_shape[:-1]:
        rows *= int(d)

    # Lane-dense packing: fold k logical rows into one 128-lane packed row.
    k = 1
    if 0 < features < 128 and 128 % features == 0:
        k = 128 // features
        while k > 1 and rows % k != 0:   # only pack when it divides evenly
            k //= 2
    width = k * features
    packed_rows = rows // k

    # Free, contiguous reshapes — no HBM copies for x; a/b tiles are tiny.
    x2 = x.reshape(packed_rows, width)
    a2 = jnp.tile(a.reshape(-1), k).reshape(1, width)
    b2 = jnp.tile(b.reshape(-1), k).reshape(1, width)

    itemsize = jnp.dtype(x.dtype).itemsize
    auto_tile, vmem_limit = _pick_tiling(packed_rows, width, itemsize)
    if tile_rows is None:
        tile_rows = auto_tile

    grid = (pl.cdiv(packed_rows, tile_rows),)

    kernel = functools.partial(_layernorm_kernel, eps=eps,
                               n_features=features, n_segments=k)

    # Advisory cost estimate so XLA overlaps this memory-bound op with
    # neighboring ops in the surrounding graph.
    cost = pl.CostEstimate(
        flops=int(7 * rows * features),
        transcendentals=int(2 * rows),
        bytes_accessed=int(2 * rows * features * itemsize + 2 * features * 4),
    )

    out = pl.pallas_call(
        kernel,
        out_shape=jax.ShapeDtypeStruct((packed_rows, width), x.dtype),
        grid_spec=pltpu.PrefetchScalarGridSpec(
            num_scalar_prefetch=0,
            grid=grid,
            in_specs=[
                pl.BlockSpec((tile_rows, width), lambda i: (i, 0)),
                pl.BlockSpec((1, width), lambda i: (0, 0)),  # a: revisited, no re-DMA
                pl.BlockSpec((1, width), lambda i: (0, 0)),  # b: revisited, no re-DMA
            ],
            out_specs=pl.BlockSpec((tile_rows, width), lambda i: (i, 0)),
        ),
        compiler_params=pltpu.CompilerParams(
            dimension_semantics=("parallel",),
            vmem_limit_bytes=vmem_limit,
        ),
        cost_estimate=cost,
    )(x2, a2, b2)

    return out.reshape(orig_shape)


def _reference(x, a, b, eps=1e-6):
    mu = jnp.mean(x, axis=-1, keepdims=True)
    # unbiased std, matching torch.std default
    var = jnp.sum((x - mu) ** 2, axis=-1, keepdims=True) / (x.shape[-1] - 1)
    sigma = jnp.sqrt(var)
    return a * (x - mu) / (sigma + eps) + b


if __name__ == "__main__":
    key = jax.random.PRNGKey(0)

    # Primary case (lane-packed path: F=32 -> k=4, packed rows 16 -> 4x128).
    batch, seq, features = 2, 8, 32
    x = jax.random.normal(key, (batch, seq, features), dtype=jnp.float32)
    # Deterministic parameter init matching nn.Parameter(torch.ones/zeros(features))
    a = jnp.ones((features,), dtype=jnp.float32)
    b = jnp.zeros((features,), dtype=jnp.float32)

    out = jax.block_until_ready(layer_norm(x, a, b, eps=1e-6))
    ref = _reference(x, a, b, eps=1e-6)
    assert out.shape == x.shape
    assert jnp.allclose(out, ref, atol=1e-5, rtol=1e-5), "mismatch vs reference (packed)"

    # Secondary case exercising the unpacked fallback (rows=15 is odd -> k=1).
    x2 = jax.random.normal(jax.random.PRNGKey(1), (3, 5, features), dtype=jnp.float32)
    out2 = jax.block_until_ready(layer_norm(x2, a, b, eps=1e-6))
    ref2 = _reference(x2, a, b, eps=1e-6)
    assert out2.shape == x2.shape
    assert jnp.allclose(out2, ref2, atol=1e-5, rtol=1e-5), "mismatch vs reference (fallback)"

    print("KERNEL_OK")
</pallas_src>

<mosaic_0001>
module attributes {stable_mosaic.version = 11 : i64} {
  func.func @_layernorm_kernel(%arg0: i32, %arg1: memref<4x128xf32, #tpu.memory_space<vmem>>, %arg2: memref<1x128xf32, #tpu.memory_space<vmem>>, %arg3: memref<1x128xf32, #tpu.memory_space<vmem>>, %arg4: memref<4x128xf32, #tpu.memory_space<vmem>>) attributes {dimension_semantics = [#tpu.dimension_semantics<parallel>], iteration_bounds = array<i64: 1>, scalar_prefetch = 0 : i64, scratch_operands = 0 : i64, tpu.core_type = #tpu.core_type<tc>, window_params = [{transform_indices = @transform_0, window_bounds = array<i64: 4, 128>}, {pipeline_mode = #tpu.pipeline_mode<synchronous>, transform_indices = @transform_1, window_bounds = array<i64: 1, 128>}, {pipeline_mode = #tpu.pipeline_mode<synchronous>, transform_indices = @transform_2, window_bounds = array<i64: 1, 128>}, {transform_indices = @transform_3, window_bounds = array<i64: 4, 128>}]} {
    %c0 = arith.constant 0 : index
    %c0_0 = arith.constant 0 : index
    %0 = vector.load %arg1[%c0, %c0_0] : memref<4x128xf32, #tpu.memory_space<vmem>>, vector<4x128xf32>
    %c0_1 = arith.constant 0 : index
    %c0_2 = arith.constant 0 : index
    %1 = vector.load %arg2[%c0_1, %c0_2] : memref<1x128xf32, #tpu.memory_space<vmem>>, vector<1x128xf32>
    %c0_3 = arith.constant 0 : index
    %c0_4 = arith.constant 0 : index
    %2 = vector.load %arg3[%c0_3, %c0_4] : memref<1x128xf32, #tpu.memory_space<vmem>>, vector<1x128xf32>
    %3 = vector.extract_strided_slice %0 {offsets = [0, 0], sizes = [4, 32], strides = [1, 1]} : vector<4x128xf32> to vector<4x32xf32>
    %cst = arith.constant dense<0.000000e+00> : vector<4xf32>
    %4 = vector.multi_reduction <add>, %3, %cst [1] : vector<4x32xf32> to vector<4xf32>
    %5 = vector.shape_cast %4 : vector<4xf32> to vector<4x1xf32>
    %cst_5 = arith.constant 3.200000e+01 : f32
    %6 = vector.broadcast %cst_5 : f32 to vector<4x1xf32>
    %7 = arith.divf %5, %6 : vector<4x1xf32>
    %8 = vector.broadcast %7 : vector<4x1xf32> to vector<4x32xf32>
    %9 = arith.subf %3, %8 : vector<4x32xf32>
    %10 = arith.mulf %9, %9 : vector<4x32xf32>
    %cst_6 = arith.constant dense<0.000000e+00> : vector<4xf32>
    %11 = vector.multi_reduction <add>, %10, %cst_6 [1] : vector<4x32xf32> to vector<4xf32>
    %12 = vector.shape_cast %11 : vector<4xf32> to vector<4x1xf32>
    %cst_7 = arith.constant 3.100000e+01 : f32
    %13 = vector.broadcast %cst_7 : f32 to vector<4x1xf32>
    %14 = arith.divf %12, %13 : vector<4x1xf32>
    %15 = math.sqrt %14 : vector<4x1xf32>
    %cst_8 = arith.constant 9.99999997E-7 : f32
    %16 = vector.broadcast %cst_8 : f32 to vector<4x1xf32>
    %17 = arith.addf %15, %16 : vector<4x1xf32>
    %18 = tpu.reciprocal %17 : vector<4x1xf32> -> vector<4x1xf32>
    %19 = vector.broadcast %18 : vector<4x1xf32> to vector<4x32xf32>
    %20 = arith.mulf %9, %19 : vector<4x32xf32>
    %21 = vector.extract_strided_slice %0 {offsets = [0, 32], sizes = [4, 32], strides = [1, 1]} : vector<4x128xf32> to vector<4x32xf32>
    %cst_9 = arith.constant dense<0.000000e+00> : vector<4xf32>
    %22 = vector.multi_reduction <add>, %21, %cst_9 [1] : vector<4x32xf32> to vector<4xf32>
    %23 = vector.shape_cast %22 : vector<4xf32> to vector<4x1xf32>
    %cst_10 = arith.constant 3.200000e+01 : f32
    %24 = vector.broadcast %cst_10 : f32 to vector<4x1xf32>
    %25 = arith.divf %23, %24 : vector<4x1xf32>
    %26 = vector.broadcast %25 : vector<4x1xf32> to vector<4x32xf32>
    %27 = arith.subf %21, %26 : vector<4x32xf32>
    %28 = arith.mulf %27, %27 : vector<4x32xf32>
    %cst_11 = arith.constant dense<0.000000e+00> : vector<4xf32>
    %29 = vector.multi_reduction <add>, %28, %cst_11 [1] : vector<4x32xf32> to vector<4xf32>
    %30 = vector.shape_cast %29 : vector<4xf32> to vector<4x1xf32>
    %cst_12 = arith.constant 3.100000e+01 : f32
    %31 = vector.broadcast %cst_12 : f32 to vector<4x1xf32>
    %32 = arith.divf %30, %31 : vector<4x1xf32>
    %33 = math.sqrt %32 : vector<4x1xf32>
    %cst_13 = arith.constant 9.99999997E-7 : f32
    %34 = vector.broadcast %cst_13 : f32 to vector<4x1xf32>
    %35 = arith.addf %33, %34 : vector<4x1xf32>
    %36 = tpu.reciprocal %35 : vector<4x1xf32> -> vector<4x1xf32>
    %37 = vector.broadcast %36 : vector<4x1xf32> to vector<4x32xf32>
    %38 = arith.mulf %27, %37 : vector<4x32xf32>
    %39 = vector.extract_strided_slice %0 {offsets = [0, 64], sizes = [4, 32], strides = [1, 1]} : vector<4x128xf32> to vector<4x32xf32>
    %cst_14 = arith.constant dense<0.000000e+00> : vector<4xf32>
    %40 = vector.multi_reduction <add>, %39, %cst_14 [1] : vector<4x32xf32> to vector<4xf32>
    %41 = vector.shape_cast %40 : vector<4xf32> to vector<4x1xf32>
    %cst_15 = arith.constant 3.200000e+01 : f32
    %42 = vector.broadcast %cst_15 : f32 to vector<4x1xf32>
    %43 = arith.divf %41, %42 : vector<4x1xf32>
    %44 = vector.broadcast %43 : vector<4x1xf32> to vector<4x32xf32>
    %45 = arith.subf %39, %44 : vector<4x32xf32>
    %46 = arith.mulf %45, %45 : vector<4x32xf32>
    %cst_16 = arith.constant dense<0.000000e+00> : vector<4xf32>
    %47 = vector.multi_reduction <add>, %46, %cst_16 [1] : vector<4x32xf32> to vector<4xf32>
    %48 = vector.shape_cast %47 : vector<4xf32> to vector<4x1xf32>
    %cst_17 = arith.constant 3.100000e+01 : f32
    %49 = vector.broadcast %cst_17 : f32 to vector<4x1xf32>
    %50 = arith.divf %48, %49 : vector<4x1xf32>
    %51 = math.sqrt %50 : vector<4x1xf32>
    %cst_18 = arith.constant 9.99999997E-7 : f32
    %52 = vector.broadcast %cst_18 : f32 to vector<4x1xf32>
    %53 = arith.addf %51, %52 : vector<4x1xf32>
    %54 = tpu.reciprocal %53 : vector<4x1xf32> -> vector<4x1xf32>
    %55 = vector.broadcast %54 : vector<4x1xf32> to vector<4x32xf32>
    %56 = arith.mulf %45, %55 : vector<4x32xf32>
    %57 = vector.extract_strided_slice %0 {offsets = [0, 96], sizes = [4, 32], strides = [1, 1]} : vector<4x128xf32> to vector<4x32xf32>
    %cst_19 = arith.constant dense<0.000000e+00> : vector<4xf32>
    %58 = vector.multi_reduction <add>, %57, %cst_19 [1] : vector<4x32xf32> to vector<4xf32>
    %59 = vector.shape_cast %58 : vector<4xf32> to vector<4x1xf32>
    %cst_20 = arith.constant 3.200000e+01 : f32
    %60 = vector.broadcast %cst_20 : f32 to vector<4x1xf32>
    %61 = arith.divf %59, %60 : vector<4x1xf32>
    %62 = vector.broadcast %61 : vector<4x1xf32> to vector<4x32xf32>
    %63 = arith.subf %57, %62 : vector<4x32xf32>
    %64 = arith.mulf %63, %63 : vector<4x32xf32>
    %cst_21 = arith.constant dense<0.000000e+00> : vector<4xf32>
    %65 = vector.multi_reduction <add>, %64, %cst_21 [1] : vector<4x32xf32> to vector<4xf32>
    %66 = vector.shape_cast %65 : vector<4xf32> to vector<4x1xf32>
    %cst_22 = arith.constant 3.100000e+01 : f32
    %67 = vector.broadcast %cst_22 : f32 to vector<4x1xf32>
    %68 = arith.divf %66, %67 : vector<4x1xf32>
    %69 = math.sqrt %68 : vector<4x1xf32>
    %cst_23 = arith.constant 9.99999997E-7 : f32
    %70 = vector.broadcast %cst_23 : f32 to vector<4x1xf32>
    %71 = arith.addf %69, %70 : vector<4x1xf32>
    %72 = tpu.reciprocal %71 : vector<4x1xf32> -> vector<4x1xf32>
    %73 = vector.broadcast %72 : vector<4x1xf32> to vector<4x32xf32>
    %74 = arith.mulf %63, %73 : vector<4x32xf32>
    %75 = tpu.concatenate %20, %38, %56, %74 in 1 : vector<4x32xf32>, vector<4x32xf32>, vector<4x32xf32>, vector<4x32xf32> -> vector<4x128xf32>
    %76 = vector.broadcast %1 : vector<1x128xf32> to vector<4x128xf32>
    %77 = arith.mulf %75, %76 : vector<4x128xf32>
    %78 = vector.broadcast %2 : vector<1x128xf32> to vector<4x128xf32>
    %79 = arith.addf %77, %78 : vector<4x128xf32>
    %c0_24 = arith.constant 0 : index
    %c0_25 = arith.constant 0 : index
    %80 = vector.load %arg4[%c0_24, %c0_25] : memref<4x128xf32, #tpu.memory_space<vmem>>, vector<4x128xf32>
    tpu.vector_store %arg4[%c0_24, %c0_25], %79 {strides = array<i32>} : memref<4x128xf32, #tpu.memory_space<vmem>>, vector<4x128xf32>,
    return
  }
  func.func @transform_0(%arg0: i32) -> (i32, i32) {
    %c0_i32 = arith.constant 0 : i32
    %c0_i32_0 = arith.constant 0 : i32
    return %arg0, %c0_i32 : i32, i32
  }
  func.func @transform_1(%arg0: i32) -> (i32, i32) {
    %c0_i32 = arith.constant 0 : i32
    %c0_i32_0 = arith.constant 0 : i32
    %c0_i32_1 = arith.constant 0 : i32
    return %c0_i32, %c0_i32_0 : i32, i32
  }
  func.func @transform_2(%arg0: i32) -> (i32, i32) {
    %c0_i32 = arith.constant 0 : i32
    %c0_i32_0 = arith.constant 0 : i32
    %c0_i32_1 = arith.constant 0 : i32
    return %c0_i32, %c0_i32_0 : i32, i32
  }
  func.func @transform_3(%arg0: i32) -> (i32, i32) {
    %c0_i32 = arith.constant 0 : i32
    %c0_i32_0 = arith.constant 0 : i32
    return %arg0, %c0_i32 : i32, i32
  }
}

</mosaic_0001>

<llo_original>
// kernel: tpu_custom_call.1
$region0: #{tpu_custom_call.1}
  #allocation0 [shape = 'u32[]', space=smem, size = 0x4, offset = 0x4, fixed_abs, tag = 'smem constant byte address 0x4 - core index']
  #allocation1 [shape = 'u32[144,128]{1,0:T(1,128)}', space=vmem, size = 0x12000, scoped, tag = 'internal scratch']
  %s0 = inlined_call_operand.hbm [shape: f32[4,128], index: 0, kind: input, shape index: {}]
  %s1 = inlined_call_operand.vmem [shape: f32[1,128], index: 1, kind: input, shape index: {}]
  %s2 = inlined_call_operand.vmem [shape: f32[1,128], index: 2, kind: input, shape index: {}]
  %s3 = inlined_call_operand.hbm [shape: f32[4,128], index: 3, kind: output, shape index: {}]
  %s4 = sld [smem:[#allocation0]]
  $region26: #{tpu_custom_call.1} parent=0
    _
  %s6 = ssub.s32 1, %s4
  %s7 = scalar_select 0, %s6, %s4
  $region1: #{tpu_custom_call.1} parent=0
    #allocation2 [shape = 'u8[2048]{0}', space=vmem, size = 0x800, scoped, tag = 'input window, operand 0, single buffered']
    #allocation3 [shape = 's32[1]{0}', space=sflag, size = 0x4, scoped, tag = 'scoped memory for tpu_custom_call.1']
    #allocation4 [shape = 's32[1]{0}', space=sflag, size = 0x4, scoped, tag = 'scoped memory for tpu_custom_call.1']
    #allocation5 [shape = 'u8[2048]{0}', space=vmem, size = 0x800, scoped, tag = 'output window, operand 0, single buffered']
    %8 = vsyncpa [#allocation3], 0
    %9 = vsyncpa [#allocation4], 0
    // Predicated region
    $region2: #{tpu_custom_call.1} parent=1 // pred_check
      _
    $region3: #{tpu_custom_call.1} parent=1 // pred_check_branch
      %11 = sbr.rel (0) target = $region5
    $region4: #{tpu_custom_call.1} parent=1 // pred_region
      %s13 = ssub.s32 64, 64
      %14 = vsyncadd [#allocation3], %s13
      %s16 = sshll.u32 [#allocation2], 4
      %s17 = int_to_ptr.vmem [resolvable:$true] %s16
      %19 = dma.hbm_to_vmem [thread:$0]  %s0, 64, %s17, [#allocation3]
    $region5: #{tpu_custom_call.1} parent=1 // pred_fallthru
      _
    // Predicated region
    $region6: #{tpu_custom_call.1} parent=1 // pred_check
      _
    $region7: #{tpu_custom_call.1} parent=1 // pred_check_branch
      %21 = sbr.rel (0) target = $region9
    $region8: #{tpu_custom_call.1} parent=1 // pred_region
      _
    $region9: #{tpu_custom_call.1} parent=1 // pred_fallthru
      _
    // Predicated region
    $region10: #{tpu_custom_call.1} parent=1 // pred_check
      _
    $region11: #{tpu_custom_call.1} parent=1 // pred_check_branch
      %23 = sbr.rel (0) target = $region13
    $region12: #{tpu_custom_call.1} parent=1 // pred_region
      _
    $region13: #{tpu_custom_call.1} parent=1 // pred_fallthru
      _
    // Predicated region
    $region14: #{tpu_custom_call.1} parent=1 // pred_check
      _
    $region15: #{tpu_custom_call.1} parent=1 // pred_check_branch
      %25 = sbr.rel (0) target = $region17
    $region16: #{tpu_custom_call.1} parent=1 // pred_region
      %26 = dma.done [#allocation3], 64
    $region17: #{tpu_custom_call.1} parent=1 // pred_fallthru
      _
    %v27 = vld [vmem:[#allocation2] sm:$0xf]
    %v28 = vld [vmem:[%s1] sm:$0x1]
    %v29 = vld [vmem:[%s2] sm:$0x1]
    %vm30 = vcmask 257024
    %v31 = vsel %vm30, %v27, 0.0
    %32 = vadd.xlane.f32.xlu0 %v31
    %v33 = vpop.xlane.xlu0 %32
    %v34 = vrcp.pop 32.0
    %v35 = vmul.f32 %v33, %v34
    %v36 = vsub.f32 %v27, %v35
    %v37 = vmul.f32 %v36, %v36
    %v38 = vsel %vm30, %v37, 0.0
    %39 = vadd.xlane.f32.xlu0 %v38
    %v40 = vpop.xlane.xlu0 %39
    %v41 = vrcp.pop 31.0
    %v42 = vmul.f32 %v40, %v41
    %v43 = vrsqrt.pop %v42
    %v44 = vmul.f32 %v42, %v43
    %vm45 = vcmp.eq.f32.partialorder %v42, inf
    %v46 = vsel %vm45, %v42, %v44
    %vm47 = vcmp.eq.f32.partialorder %v42, 0.0
    %v48 = vand.u32 %v42, 2147483648
    %v49 = vsel %vm47, %v48, %v46
    %v50 = vadd.f32 %v49, 1e-06
    %v51 = vrcp.pop %v50
    %v52 = vmul.f32 %v36, %v51
    %54 = vrot.lane.b32.xlu0 %v27, 96
    %v55 = vpop.permute.xlu0 %54
    %v57 = vsel %vm30, %v55, 0.0
    %58 = vadd.xlane.f32.xlu0 %v57
    %v59 = vpop.xlane.xlu0 %58
    %v60 = vmul.f32 %v59, %v34
    %v61 = vsub.f32 %v27, %v60
    %v62 = vmul.f32 %v61, %v61
    %64 = vrot.lane.b32.xlu0 %v62, 96
    %v65 = vpop.permute.xlu0 %64
    %v67 = vsel %vm30, %v65, 0.0
    %68 = vadd.xlane.f32.xlu0 %v67
    %v69 = vpop.xlane.xlu0 %68
    %v70 = vmul.f32 %v69, %v41
    %v71 = vrsqrt.pop %v70
    %v72 = vmul.f32 %v70, %v71
    %vm73 = vcmp.eq.f32.partialorder %v70, inf
    %v74 = vsel %vm73, %v70, %v72
    %vm75 = vcmp.eq.f32.partialorder %v70, 0.0
    %v76 = vand.u32 %v70, 2147483648
    %v77 = vsel %vm75, %v76, %v74
    %v78 = vadd.f32 %v77, 1e-06
    %v79 = vrcp.pop %v78
    %v80 = vmul.f32 %v61, %v79
    %81 = vrot.lane.b32.xlu0 %v27, 64
    %v82 = vpop.permute.xlu0 %81
    %v84 = vsel %vm30, %v82, 0.0
    %85 = vadd.xlane.f32.xlu0 %v84
    %v86 = vpop.xlane.xlu0 %85
    %v87 = vmul.f32 %v86, %v34
    %v88 = vsub.f32 %v27, %v87
    %v89 = vmul.f32 %v88, %v88
    %91 = vrot.lane.b32.xlu0 %v89, 64
    %v92 = vpop.permute.xlu0 %91
    %v94 = vsel %vm30, %v92, 0.0
    %95 = vadd.xlane.f32.xlu0 %v94
    %v96 = vpop.xlane.xlu0 %95
    %v97 = vmul.f32 %v96, %v41
    %v98 = vrsqrt.pop %v97
    %v99 = vmul.f32 %v97, %v98
    %vm100 = vcmp.eq.f32.partialorder %v97, inf
    %v101 = vsel %vm100, %v97, %v99
    %vm102 = vcmp.eq.f32.partialorder %v97, 0.0
    %v103 = vand.u32 %v97, 2147483648
    %v104 = vsel %vm102, %v103, %v101
    %v105 = vadd.f32 %v104, 1e-06
    %v106 = vrcp.pop %v105
    %v107 = vmul.f32 %v88, %v106
    %108 = vrot.lane.b32.xlu0 %v27, 32
    %v109 = vpop.permute.xlu0 %108
    %v111 = vsel %vm30, %v109, 0.0
    %112 = vadd.xlane.f32.xlu0 %v111
    %v113 = vpop.xlane.xlu0 %112
    %v114 = vmul.f32 %v113, %v34
    %v115 = vsub.f32 %v27, %v114
    %v116 = vmul.f32 %v115, %v115
    %118 = vrot.lane.b32.xlu0 %v116, 32
    %v119 = vpop.permute.xlu0 %118
    %v121 = vsel %vm30, %v119, 0.0
    %122 = vadd.xlane.f32.xlu0 %v121
    %v123 = vpop.xlane.xlu0 %122
    %v124 = vmul.f32 %v123, %v41
    %v125 = vrsqrt.pop %v124
    %v126 = vmul.f32 %v124, %v125
    %vm127 = vcmp.eq.f32.partialorder %v124, inf
    %v128 = vsel %vm127, %v124, %v126
    %vm129 = vcmp.eq.f32.partialorder %v124, 0.0
    %v130 = vand.u32 %v124, 2147483648
    %v131 = vsel %vm129, %v130, %v128
    %v132 = vadd.f32 %v131, 1e-06
    %v133 = vrcp.pop %v132
    %v134 = vmul.f32 %v115, %v133
    %vm135 = vcmask 261120
    %v136 = vsel %vm135, %v52, %v80
    %vm137 = vcmask 523264
    %v138 = vsel %vm137, %v136, %v107
    %vm139 = vcmask 785408
    %v140 = vsel %vm139, %v138, %v134
    %v142 = vlaneseq
    %v143 = vshrl.u32 %v142, 7
    %v144 = vsub.s32 0, %v143
    %v145 = vrot.slane %v28, %v144
    %v147 = vmul.f32 %v140, %v145
    %v149 = vlaneseq
    %v150 = vshrl.u32 %v149, 7
    %v151 = vsub.s32 0, %v150
    %v152 = vrot.slane %v29, %v151
    %v154 = vadd.f32 %v147, %v152
    %155 = vst [vmem:[#allocation5] sm:$0xf] %v154
    // Predicated region
    $region18: #{tpu_custom_call.1} parent=1 // pred_check
      _
    $region19: #{tpu_custom_call.1} parent=1 // pred_check_branch
      %157 = sbr.rel (0) target = $region21
    $region20: #{tpu_custom_call.1} parent=1 // pred_region
      %s159 = ssub.s32 64, 64
      %160 = vsyncadd [#allocation4], %s159
      %s162 = sshll.u32 [#allocation5], 4
      %s163 = int_to_ptr.vmem [resolvable:$true] %s162
      %165 = dma.vmem_to_hbm [thread:$0]  %s163, 64, %s3, [#allocation4]
    $region21: #{tpu_custom_call.1} parent=1 // pred_fallthru
      _
    // Predicated region
    $region22: #{tpu_custom_call.1} parent=1 // pred_check
      _
    $region23: #{tpu_custom_call.1} parent=1 // pred_check_branch
      %167 = sbr.rel (0) target = $region25
    $region24: #{tpu_custom_call.1} parent=1 // pred_region
      %168 = dma.done [#allocation4], 64
    $region25: #{tpu_custom_call.1} parent=1 // pred_fallthru
      _
    %169 = vsyncpa [#allocation3], 1
    %170 = vsyncpa [#allocation4], 1

</llo_original>
